<compile_context>
chip_gen: v5e
topology: v5e:2x2
jax: 0.10.0
libtpu: 0.0.40
codegen_flags: <defaults>
</compile_context>

<pallas_src>
import functools

import jax
import jax.numpy as jnp
from jax.experimental import pallas as pl
from jax.experimental.pallas import tpu as pltpu


# ----------------------------------------------------------------------------
# Helpers
# ----------------------------------------------------------------------------
def _round_up(x: int, m: int) -> int:
    return (x + m - 1) // m * m


def _cdiv(a: int, b: int) -> int:
    return (a + b - 1) // b


_VMEM_BUDGET = 40 << 20  # target working set; leaves headroom under v7x's 64 MiB


def _is_v5e() -> bool:
    try:
        kind = jax.devices()[0].device_kind.lower()
    except Exception:
        return False
    return ("v5 lite" in kind) or ("v5e" in kind) or ("v5litepod" in kind)


def _choose_batch_tile(batch: int, block_b: int, per_row_bytes: int,
                       fixed_bytes: int):
    """Pick a sublane-aligned batch tile.

    Big tiles (memory-bound kernels; amortize ~0.35us/grid-step overhead), but
    capped so the grid has >= 2 steps when the batch allows it (both v7x
    TensorCores get work), and shrunk if the VMEM working set would blow budget.
    Returns (tile_rows, batch_rounded_up_to_8).
    """
    b8 = _round_up(max(batch, 1), 8)
    tb = min(block_b, max(8, _round_up(_cdiv(b8, 2), 8)), b8)
    tb = max(8, _round_up(tb, 8))
    while tb > 8 and fixed_bytes + tb * per_row_bytes > _VMEM_BUDGET:
        tb = max(8, _round_up(tb // 2, 8))
    return tb, b8


def _pad_batch_to(x, b_target: int):
    b = x.shape[0]
    if b == b_target:
        return x
    return jnp.pad(x, ((0, b_target - b), (0, 0)))


def _vmem_limit(est_bytes: int) -> int:
    return int(min(max(int(est_bytes * 1.4) + (2 << 20), 32 << 20), 64 << 20))


# ----------------------------------------------------------------------------
# CatProject: parameter preparation (one-time, OUTSIDE the per-step jit)
# ----------------------------------------------------------------------------
def prepare_cat_project_params(weight, bias, *, compute_dtype=jnp.bfloat16,
                               pack=None):
    """weight: [S, S+U] (PyTorch nn.Linear layout, y = x @ W^T + b); bias: [S].

    pack=None -> auto: packed single-K kernel on v6e/v7x, split two-dot kernel on v5e.
    """
    weight = jnp.asarray(weight, jnp.float32)
    bias = jnp.asarray(bias, jnp.float32)
    s_dim = weight.shape[0]
    u_dim = weight.shape[1] - s_dim
    b2d = bias.reshape(1, s_dim).astype(jnp.float32)
    if pack is None:
        pack = not _is_v5e()
    w_p = weight[:, :s_dim].T  # (S, S)
    w_u = weight[:, s_dim:].T  # (U, S)
    if pack:
        s_pad = _round_up(s_dim, 128)  # lane-align the start of the upd half
        w_packed = jnp.zeros((s_pad + u_dim, s_dim), jnp.float32)
        w_packed = w_packed.at[:s_dim].set(w_p).at[s_pad:].set(w_u)
        return dict(mode="packed", w=w_packed.astype(compute_dtype), b=b2d,
                    state_dim=s_dim, update_dim=u_dim, s_pad=s_pad)
    return dict(mode="split", w_p=w_p.astype(compute_dtype),
                w_u=w_u.astype(compute_dtype), b=b2d,
                state_dim=s_dim, update_dim=u_dim, s_pad=s_dim)


# ----------------------------------------------------------------------------
# CatProject: packed kernel (single K = S_pad + U contraction)
# ----------------------------------------------------------------------------
def _cat_project_packed_kernel(p_ref, u_ref, w_ref, b_ref, o_ref, x_ref, *,
                               state_dim: int, s_pad: int):
    # Pack both halves into one contiguous bf16 VMEM tile; upd starts at a
    # 128-lane-aligned offset so stores stay lane-dense.
    x_ref[:, :state_dim] = p_ref[...].astype(x_ref.dtype)
    if s_pad != state_dim:
        # Zero the alignment gap (its weight rows are zero, but keep the
        # operand finite to avoid Inf*0 from uninitialized VMEM).
        x_ref[:, state_dim:s_pad] = jnp.zeros(
            (x_ref.shape[0], s_pad - state_dim), x_ref.dtype)
    x_ref[:, s_pad:] = u_ref[...].astype(x_ref.dtype)
    acc = jnp.dot(x_ref[...], w_ref[...], preferred_element_type=jnp.float32)
    acc = jnp.maximum(acc + b_ref[...], 0.0)       # bias + ReLU in f32
    # Dropout (eval/inference mode) == identity.
    # TODO(synk): train-mode dropout needs pltpu.prng_seed/prng_random_bits.
    o_ref[...] = acc.astype(o_ref.dtype)


@functools.partial(jax.jit, static_argnames=("s_pad", "block_b"))
def _cat_project_packed(prev, upd, w, b2d, *, s_pad: int, block_b: int):
    B, S = prev.shape
    U = upd.shape[-1]
    in_isz = prev.dtype.itemsize
    w_bytes = w.size * w.dtype.itemsize
    # double-buffered in/out tiles + packing scratch, per batch row
    per_row = 2 * (S + U) * in_isz + 2 * S * in_isz + (s_pad + U) * w.dtype.itemsize
    fixed = 2 * w_bytes + 2 * b2d.size * b2d.dtype.itemsize
    TB, B8 = _choose_batch_tile(B, block_b, per_row, fixed)
    prev = _pad_batch_to(prev, B8)
    upd = _pad_batch_to(upd, B8)

    cost = pl.CostEstimate(
        flops=2 * B8 * (s_pad + U) * S, transcendentals=0,
        bytes_accessed=B8 * (S + U) * in_isz + w_bytes
        + b2d.size * b2d.dtype.itemsize + B8 * S * in_isz)

    out = pl.pallas_call(
        functools.partial(_cat_project_packed_kernel, state_dim=S, s_pad=s_pad),
        out_shape=jax.ShapeDtypeStruct((B8, S), prev.dtype),
        grid_spec=pltpu.PrefetchScalarGridSpec(
            num_scalar_prefetch=0,
            grid=(_cdiv(B8, TB),),                      # ragged tail allowed
            in_specs=[
                pl.BlockSpec((TB, S), lambda i: (i, 0)),          # prev tile
                pl.BlockSpec((TB, U), lambda i: (i, 0)),          # upd tile
                pl.BlockSpec((s_pad + U, S), lambda i: (0, 0)),   # weight: resident
                pl.BlockSpec((1, S), lambda i: (0, 0)),           # bias:   resident
            ],
            out_specs=pl.BlockSpec((TB, S), lambda i: (i, 0)),
            scratch_shapes=[pltpu.VMEM((TB, s_pad + U), w.dtype)],
        ),
        compiler_params=pltpu.CompilerParams(
            dimension_semantics=("parallel",),
            vmem_limit_bytes=_vmem_limit(fixed + TB * per_row),
        ),
        cost_estimate=cost,
    )(prev, upd, w, b2d)
    return out[:B] if B8 != B else out


# ----------------------------------------------------------------------------
# CatProject: split kernel (two dots, shared f32 accumulator) — v5e default
# ----------------------------------------------------------------------------
def _cat_project_split_kernel(p_ref, u_ref, wp_ref, wu_ref, b_ref, o_ref):
    acc = jnp.dot(p_ref[...].astype(wp_ref.dtype), wp_ref[...],
                  preferred_element_type=jnp.float32)
    acc = acc + jnp.dot(u_ref[...].astype(wu_ref.dtype), wu_ref[...],
                        preferred_element_type=jnp.float32)
    acc = jnp.maximum(acc + b_ref[...], 0.0)
    # Dropout (eval/inference mode) == identity.
    o_ref[...] = acc.astype(o_ref.dtype)


@functools.partial(jax.jit, static_argnames=("block_b",))
def _cat_project_split(prev, upd, w_p, w_u, b2d, *, block_b: int):
    B, S = prev.shape
    U = upd.shape[-1]
    in_isz = prev.dtype.itemsize
    w_bytes = (w_p.size + w_u.size) * w_p.dtype.itemsize
    per_row = 2 * (S + U) * in_isz + 2 * S * in_isz
    fixed = 2 * w_bytes + 2 * b2d.size * b2d.dtype.itemsize
    TB, B8 = _choose_batch_tile(B, block_b, per_row, fixed)
    prev = _pad_batch_to(prev, B8)
    upd = _pad_batch_to(upd, B8)

    cost = pl.CostEstimate(
        flops=2 * B8 * (S + U) * S, transcendentals=0,
        bytes_accessed=B8 * (S + U) * in_isz + w_bytes
        + b2d.size * b2d.dtype.itemsize + B8 * S * in_isz)

    out = pl.pallas_call(
        _cat_project_split_kernel,
        out_shape=jax.ShapeDtypeStruct((B8, S), prev.dtype),
        grid_spec=pltpu.PrefetchScalarGridSpec(
            num_scalar_prefetch=0,
            grid=(_cdiv(B8, TB),),
            in_specs=[
                pl.BlockSpec((TB, S), lambda i: (i, 0)),
                pl.BlockSpec((TB, U), lambda i: (i, 0)),
                pl.BlockSpec((S, S), lambda i: (0, 0)),    # w_prev: resident
                pl.BlockSpec((U, S), lambda i: (0, 0)),    # w_upd:  resident
                pl.BlockSpec((1, S), lambda i: (0, 0)),    # bias:   resident
            ],
            out_specs=pl.BlockSpec((TB, S), lambda i: (i, 0)),
        ),
        compiler_params=pltpu.CompilerParams(
            dimension_semantics=("parallel",),
            vmem_limit_bytes=_vmem_limit(fixed + TB * per_row),
        ),
        cost_estimate=cost,
    )(prev, upd, w_p, w_u, b2d)
    return out[:B] if B8 != B else out


def cat_project_update(prev, upd, params, *, block_b=1024):
    if params["mode"] == "packed":
        return _cat_project_packed(prev, upd, params["w"], params["b"],
                                   s_pad=params["s_pad"], block_b=block_b)
    return _cat_project_split(prev, upd, params["w_p"], params["w_u"],
                              params["b"], block_b=block_b)


# ----------------------------------------------------------------------------
# Add
# ----------------------------------------------------------------------------
def _add_kernel(p_ref, u_ref, o_ref):
    o_ref[...] = p_ref[...] + u_ref[...]


@functools.partial(jax.jit, static_argnames=("block_b",))
def add_update(prev, upd, *, block_b=4096):
    """Pure-bandwidth op: large row tiles (>=1-2 MiB/block), parallel batch axis."""
    B, S = prev.shape
    isz = prev.dtype.itemsize
    per_row = 6 * S * isz  # 2 inputs + 1 output, double-buffered
    TB, B8 = _choose_batch_tile(B, block_b, per_row, 0)
    prev = _pad_batch_to(prev, B8)
    upd = _pad_batch_to(upd, B8)

    out = pl.pallas_call(
        _add_kernel,
        out_shape=jax.ShapeDtypeStruct((B8, S), prev.dtype),
        grid=(_cdiv(B8, TB),),
        in_specs=[
            pl.BlockSpec((TB, S), lambda i: (i, 0)),
            pl.BlockSpec((TB, S), lambda i: (i, 0)),
        ],
        out_specs=pl.BlockSpec((TB, S), lambda i: (i, 0)),
        compiler_params=pltpu.CompilerParams(
            dimension_semantics=("parallel",),
            vmem_limit_bytes=_vmem_limit(TB * per_row),
        ),
    )(prev, upd)
    return out[:B] if B8 != B else out


# ----------------------------------------------------------------------------
# PassThrough / dispatcher
# ----------------------------------------------------------------------------
def pass_through_update(prev, upd):
    return upd


def state_updater_forward(method, prev, upd, cat_project_params=None,
                          block_b=1024):
    # Note: for tiny batches (grid of 1) this is launch-latency bound and a
    # plain jnp expression would be equivalent; tile heuristics target large B.
    if method == "CatProject":
        return cat_project_update(prev, upd, cat_project_params, block_b=block_b)
    elif method == "Add":
        return add_update(prev, upd)
    elif method == "PassThrough":
        return pass_through_update(prev, upd)
    else:
        # TODO(synk): Gate method requires the (unprovided) Gate submodule.
        raise ValueError(f"Unsupported update method `{method}`.")


# ----------------------------------------------------------------------------
# Main
# ----------------------------------------------------------------------------
def _torch_linear_init(kw, kb, out_f, in_f):
    bound = 1.0 / (in_f ** 0.5)
    w = jax.random.uniform(kw, (out_f, in_f), minval=-bound, maxval=bound,
                           dtype=jnp.float32)
    b = jax.random.uniform(kb, (out_f,), minval=-bound, maxval=bound,
                           dtype=jnp.float32)
    return w, b


if __name__ == "__main__":
    key = jax.random.PRNGKey(0)
    keys = jax.random.split(key, 8)

    batch = 16            # small demo; 2-step parallel grid (megacore-friendly)
    state_dim = 128
    update_dim = 128

    prev = jax.random.normal(keys[0], (batch, state_dim), dtype=jnp.float32)
    upd = jax.random.normal(keys[1], (batch, update_dim), dtype=jnp.float32)
    weight, bias = _torch_linear_init(keys[2], keys[3],
                                      state_dim, state_dim + update_dim)

    # --- CatProject (128-aligned dims), both kernel variants ---
    ref_cp = jnp.maximum(
        jnp.concatenate([prev, upd], axis=-1) @ weight.T + bias, 0.0)
    for pack in (True, False):
        params = prepare_cat_project_params(weight, bias, pack=pack)
        out_cp = jax.block_until_ready(
            state_updater_forward("CatProject", prev, upd, params))
        assert out_cp.shape == (batch, state_dim)
        # bf16 operands / f32 accumulation -> relaxed tolerance vs f32 reference
        assert jnp.allclose(out_cp, ref_cp, atol=5e-2, rtol=5e-2), (
            pack, float(jnp.max(jnp.abs(out_cp - ref_cp))))

    # --- CatProject with non-128-aligned feature dims (exercises the
    #     lane-aligned packing gap + masked-store paths) ---
    s2, u2 = 96, 160
    prev2 = jax.random.normal(keys[4], (batch, s2), dtype=jnp.float32)
    upd2 = jax.random.normal(keys[5], (batch, u2), dtype=jnp.float32)
    w2, b2 = _torch_linear_init(keys[6], keys[7], s2, s2 + u2)
    ref2 = jnp.maximum(jnp.concatenate([prev2, upd2], axis=-1) @ w2.T + b2, 0.0)
    for pack in (True, False):
        params2 = prepare_cat_project_params(w2, b2, pack=pack)
        out2 = jax.block_until_ready(
            state_updater_forward("CatProject", prev2, upd2, params2))
        assert out2.shape == (batch, s2)
        assert jnp.allclose(out2, ref2, atol=5e-2, rtol=5e-2), (
            pack, float(jnp.max(jnp.abs(out2 - ref2))))

    # --- Add (requires state_dim == update_dim) ---
    out_add = jax.block_until_ready(state_updater_forward("Add", prev, upd))
    assert jnp.allclose(out_add, prev + upd, atol=1e-6)

    # --- PassThrough ---
    out_pt = jax.block_until_ready(
        state_updater_forward("PassThrough", prev, upd))
    assert jnp.allclose(out_pt, upd)

    print("KERNEL_OK")
</pallas_src>

<mosaic_0001>
module attributes {stable_mosaic.version = 11 : i64} {
  func.func @_cat_project_packed_kernel(%arg0: i32, %arg1: memref<8x128xf32, #tpu.memory_space<vmem>>, %arg2: memref<8x128xf32, #tpu.memory_space<vmem>>, %arg3: memref<256x128xbf16, #tpu.memory_space<vmem>>, %arg4: memref<1x128xf32, #tpu.memory_space<vmem>>, %arg5: memref<8x128xf32, #tpu.memory_space<vmem>>, %arg6: memref<8x256xbf16, #tpu.memory_space<vmem>>) attributes {dimension_semantics = [#tpu.dimension_semantics<parallel>], iteration_bounds = array<i64: 2>, scalar_prefetch = 0 : i64, scratch_operands = 1 : i64, tpu.core_type = #tpu.core_type<tc>, window_params = [{transform_indices = @transform_0, window_bounds = array<i64: 8, 128>}, {transform_indices = @transform_1, window_bounds = array<i64: 8, 128>}, {pipeline_mode = #tpu.pipeline_mode<synchronous>, transform_indices = @transform_2, window_bounds = array<i64: 256, 128>}, {pipeline_mode = #tpu.pipeline_mode<synchronous>, transform_indices = @transform_3, window_bounds = array<i64: 1, 128>}, {transform_indices = @transform_4, window_bounds = array<i64: 8, 128>}]} {
    %c0 = arith.constant 0 : index
    %c0_0 = arith.constant 0 : index
    %0 = vector.load %arg1[%c0, %c0_0] : memref<8x128xf32, #tpu.memory_space<vmem>>, vector<8x128xf32>
    %1 = arith.truncf %0 : vector<8x128xf32> to vector<8x128xbf16>
    %c0_1 = arith.constant 0 : index
    %c0_2 = arith.constant 0 : index
    %2 = vector.load %arg6[%c0_1, %c0_2] : memref<8x256xbf16, #tpu.memory_space<vmem>>, vector<8x128xbf16>
    tpu.vector_store %arg6[%c0_1, %c0_2], %1 {strides = array<i32>} : memref<8x256xbf16, #tpu.memory_space<vmem>>, vector<8x128xbf16>,
    %c0_3 = arith.constant 0 : index
    %c0_4 = arith.constant 0 : index
    %3 = vector.load %arg2[%c0_3, %c0_4] : memref<8x128xf32, #tpu.memory_space<vmem>>, vector<8x128xf32>
    %4 = arith.truncf %3 : vector<8x128xf32> to vector<8x128xbf16>
    %c0_5 = arith.constant 0 : index
    %c128 = arith.constant 128 : index
    %5 = vector.load %arg6[%c0_5, %c128] : memref<8x256xbf16, #tpu.memory_space<vmem>>, vector<8x128xbf16>
    tpu.vector_store %arg6[%c0_5, %c128], %4 {strides = array<i32>} : memref<8x256xbf16, #tpu.memory_space<vmem>>, vector<8x128xbf16>,
    %c0_6 = arith.constant 0 : index
    %c0_7 = arith.constant 0 : index
    %6 = vector.load %arg6[%c0_6, %c0_7] : memref<8x256xbf16, #tpu.memory_space<vmem>>, vector<8x256xbf16>
    %c0_8 = arith.constant 0 : index
    %c0_9 = arith.constant 0 : index
    %7 = vector.load %arg3[%c0_8, %c0_9] : memref<256x128xbf16, #tpu.memory_space<vmem>>, vector<256x128xbf16>
    %cst = arith.constant dense<0.000000e+00> : vector<8x128xf32>
    %8 = tpu.matmul %6, %7, %cst {dimension_numbers = #tpu.dot_dimension_numbers<[1], [0], [0], [1], [0, 0, 1, 1], [], []>} : vector<8x256xbf16>, vector<256x128xbf16>, vector<8x128xf32> -> vector<8x128xf32>
    %c0_10 = arith.constant 0 : index
    %c0_11 = arith.constant 0 : index
    %9 = vector.load %arg4[%c0_10, %c0_11] : memref<1x128xf32, #tpu.memory_space<vmem>>, vector<1x128xf32>
    %10 = vector.broadcast %9 : vector<1x128xf32> to vector<8x128xf32>
    %11 = arith.addf %8, %10 : vector<8x128xf32>
    %cst_12 = arith.constant 0.000000e+00 : f32
    %12 = vector.broadcast %cst_12 : f32 to vector<8x128xf32>
    %13 = arith.maximumf %11, %12 : vector<8x128xf32>
    %c0_13 = arith.constant 0 : index
    %c0_14 = arith.constant 0 : index
    %14 = vector.load %arg5[%c0_13, %c0_14] : memref<8x128xf32, #tpu.memory_space<vmem>>, vector<8x128xf32>
    tpu.vector_store %arg5[%c0_13, %c0_14], %13 {strides = array<i32>} : memref<8x128xf32, #tpu.memory_space<vmem>>, vector<8x128xf32>,
    return
  }
  func.func @transform_0(%arg0: i32) -> (i32, i32) {
    %c0_i32 = arith.constant 0 : i32
    %c0_i32_0 = arith.constant 0 : i32
    return %arg0, %c0_i32 : i32, i32
  }
  func.func @transform_1(%arg0: i32) -> (i32, i32) {
    %c0_i32 = arith.constant 0 : i32
    %c0_i32_0 = arith.constant 0 : i32
    return %arg0, %c0_i32 : i32, i32
  }
  func.func @transform_2(%arg0: i32) -> (i32, i32) {
    %c0_i32 = arith.constant 0 : i32
    %c0_i32_0 = arith.constant 0 : i32
    %c0_i32_1 = arith.constant 0 : i32
    return %c0_i32, %c0_i32_0 : i32, i32
  }
  func.func @transform_3(%arg0: i32) -> (i32, i32) {
    %c0_i32 = arith.constant 0 : i32
    %c0_i32_0 = arith.constant 0 : i32
    %c0_i32_1 = arith.constant 0 : i32
    return %c0_i32, %c0_i32_0 : i32, i32
  }
  func.func @transform_4(%arg0: i32) -> (i32, i32) {
    %c0_i32 = arith.constant 0 : i32
    %c0_i32_0 = arith.constant 0 : i32
    return %arg0, %c0_i32 : i32, i32
  }
}

</mosaic_0001>

<llo_original>
// kernel: _cat_project_packed.1
$region0: #{_cat_project_packed.1}
  #allocation0 [shape = 'u32[]', space=smem, size = 0x4, offset = 0x4, fixed_abs, tag = 'smem constant byte address 0x4 - core index']
  #allocation1 [shape = 'u32[72,128]{1,0:T(1,128)}', space=vmem, size = 0x9000, scoped, tag = 'internal scratch']
  #allocation2 [shape = 'bf16[8,256]{1,0:T(8,128)(2,1)}', space=vmem, size = 0x1000, scoped, tag = 'scratch operand']
  %s0 = inlined_call_operand.hbm [shape: f32[16,128], index: 0, kind: input, shape index: {}]
  %s1 = inlined_call_operand.hbm [shape: f32[16,128], index: 1, kind: input, shape index: {}]
  %s2 = inlined_call_operand.hbm [shape: bf16[256,128], index: 2, kind: input, shape index: {}]
  %s3 = inlined_call_operand.vmem [shape: f32[1,128], index: 3, kind: input, shape index: {}]
  %s4 = inlined_call_operand.hbm [shape: f32[16,128], index: 4, kind: output, shape index: {}]
  %s5 = sld [smem:[#allocation0]]
  $region61: #{_cat_project_packed.1} parent=0
    _
  %s7 = ssub.s32 1, %s5
  %s8 = scalar_select 0, %s7, %s5
  $region1: #{_cat_project_packed.1} parent=0
    #allocation3 [shape = 'u8[8192]{0}', space=vmem, size = 0x2000, scoped, tag = 'input window, operand 0']
    #allocation4 [shape = 's32[2]{0}', space=sflag, size = 0x8, scoped, tag = 'scoped memory for _cat_project_packed.1']
    #allocation5 [shape = 's32[2]{0}', space=sflag, size = 0x8, scoped, tag = 'scoped memory for _cat_project_packed.1']
    #allocation6 [shape = 'u8[8192]{0}', space=vmem, size = 0x2000, scoped, tag = 'input window, operand 1']
    #allocation7 [shape = 's32[2]{0}', space=sflag, size = 0x8, scoped, tag = 'scoped memory for _cat_project_packed.1']
    #allocation8 [shape = 'u8[65536]{0}', space=vmem, size = 0x10000, scoped, tag = 'input window, operand 2, single buffered']
    #allocation9 [shape = 'u8[8192]{0}', space=vmem, size = 0x2000, scoped, tag = 'output window, operand 0']
    %9 = vsyncpa [#allocation4], 0
    %s10 = scalar_lea.sflag [#allocation4], 1
    %11 = vsyncpa %s10, 0
    %12 = vsyncpa [#allocation7], 0
    %s13 = scalar_lea.sflag [#allocation7], 1
    %14 = vsyncpa %s13, 0
    %15 = vsyncpa [#allocation5], 0
    %s16 = scalar_lea.sflag [#allocation5], 1
    %17 = vsyncpa %s16, 0
    loop: start=0, step=1, limit=4
    $region2: #{_cat_project_packed.1} parent=1 // loop_pre_header
      _
    $region3: #{_cat_project_packed.1} parent=1 // loop_header
      %s19 = sphi 0, %s23
      %p20 = scmp.ge.s32.totalorder %s19, 4
      %s29 = sphi 0, %s31
      %s32 = sphi 0, %s29
      %s33 = sphi 0, %s32
      %s49 = sphi 0, %s33
      %s55 = sphi 0, %s57
      %s58 = sphi 0, %s55
      %s59 = sphi 0, %s58
      %s75 = sphi 0, %s59
      %s79 = sphi 0, %s79
      %s81 = sphi 0, %s79
      %s82 = sphi 0, %s81
      %s96 = sphi 0, %s82
      %s100 = sphi 0, %s100
      %s102 = sphi 0, %s100
      %s103 = sphi 0, %s102
      %s117 = sphi 0, %s103
      %s123 = sphi 0, %s125
      %s126 = sphi 0, %s123
      %s127 = sphi 0, %s126
      %s143 = sphi 0, %s127
    $region4: #{_cat_project_packed.1} parent=1 // loop_header_branch
      %22 = sbr.rel (%p20) target = $region8
    $region5: #{_cat_project_packed.1} parent=1 // loop_body
      %s24 = ssub.s32 %s19, 1
      %s25 = ssub.s32 %s19, 2
      %s26 = sadd.s32 %s19, 1
      %s27 = ssub.s32 %s19, %s26
      %p28 = scmp.eq.s32.totalorder %s27, 0
      %s30 = sadd.s32 %s29, 1
      %s31 = scalar_select %p28, %s29, %s30
      %p34 = pneg %p28
      %p35 = scmp.eq.s32.totalorder %s19, 1
      %p36 = por %p34, %p35
      %p37 = scmp.ne.s32.totalorder %s29, %s32
      %p38 = scmp.eq.s32.totalorder %s19, 0
      %p39 = por %p37, %p38
      %p40 = scmp.ne.s32.totalorder %s29, %s32
      %p41 = scmp.eq.s32.totalorder %s24, 1
      %p42 = por %p40, %p41
      %p43 = scmp.ne.s32.totalorder %s32, %s33
      %p44 = scmp.eq.s32.totalorder %s24, 0
      %p45 = por %p43, %p44
      %p46 = scmp.ne.s32.totalorder %s32, %s33
      %p47 = scmp.eq.s32.totalorder %s25, 1
      %p48 = por %p46, %p47
      %p50 = scmp.ne.s32.totalorder %s33, %s49
      %p51 = scmp.eq.s32.totalorder %s25, 0
      %p52 = por %p50, %p51
      %s53 = ssub.s32 %s19, %s26
      %p54 = scmp.eq.s32.totalorder %s53, 0
      %s56 = sadd.s32 %s55, 1
      %s57 = scalar_select %p54, %s55, %s56
      %p60 = pneg %p54
      %p61 = scmp.eq.s32.totalorder %s19, 1
      %p62 = por %p60, %p61
      %p63 = scmp.ne.s32.totalorder %s55, %s58
      %p64 = scmp.eq.s32.totalorder %s19, 0
      %p65 = por %p63, %p64
      %p66 = scmp.ne.s32.totalorder %s55, %s58
      %p67 = scmp.eq.s32.totalorder %s24, 1
      %p68 = por %p66, %p67
      %p69 = scmp.ne.s32.totalorder %s58, %s59
      %p70 = scmp.eq.s32.totalorder %s24, 0
      %p71 = por %p69, %p70
      %p72 = scmp.ne.s32.totalorder %s58, %s59
      %p73 = scmp.eq.s32.totalorder %s25, 1
      %p74 = por %p72, %p73
      %p76 = scmp.ne.s32.totalorder %s59, %s75
      %p77 = scmp.eq.s32.totalorder %s25, 0
      %p78 = por %p76, %p77
      %s80 = sadd.s32 %s79, 1
      %p83 = scmp.eq.s32.totalorder %s19, 1
      %p84 = scmp.ne.s32.totalorder %s79, %s81
      %p85 = scmp.eq.s32.totalorder %s19, 0
      %p86 = por %p84, %p85
      %p87 = scmp.ne.s32.totalorder %s79, %s81
      %p88 = scmp.eq.s32.totalorder %s24, 1
      %p89 = por %p87, %p88
      %p90 = scmp.ne.s32.totalorder %s81, %s82
      %p91 = scmp.eq.s32.totalorder %s24, 0
      %p92 = por %p90, %p91
      %p93 = scmp.ne.s32.totalorder %s81, %s82
      %p94 = scmp.eq.s32.totalorder %s25, 1
      %p95 = por %p93, %p94
      %p97 = scmp.ne.s32.totalorder %s82, %s96
      %p98 = scmp.eq.s32.totalorder %s25, 0
      %p99 = por %p97, %p98
      %s101 = sadd.s32 %s100, 1
      %p104 = scmp.eq.s32.totalorder %s19, 1
      %p105 = scmp.ne.s32.totalorder %s100, %s102
      %p106 = scmp.eq.s32.totalorder %s19, 0
      %p107 = por %p105, %p106
      %p108 = scmp.ne.s32.totalorder %s100, %s102
      %p109 = scmp.eq.s32.totalorder %s24, 1
      %p110 = por %p108, %p109
      %p111 = scmp.ne.s32.totalorder %s102, %s103
      %p112 = scmp.eq.s32.totalorder %s24, 0
      %p113 = por %p111, %p112
      %p114 = scmp.ne.s32.totalorder %s102, %s103
      %p115 = scmp.eq.s32.totalorder %s25, 1
      %p116 = por %p114, %p115
      %p118 = scmp.ne.s32.totalorder %s103, %s117
      %p119 = scmp.eq.s32.totalorder %s25, 0
      %p120 = por %p118, %p119
      %s121 = ssub.s32 %s19, %s26
      %p122 = scmp.eq.s32.totalorder %s121, 0
      %s124 = sadd.s32 %s123, 1
      %s125 = scalar_select %p122, %s123, %s124
      %p128 = pneg %p122
      %p129 = scmp.eq.s32.totalorder %s19, 1
      %p130 = por %p128, %p129
      %p131 = scmp.ne.s32.totalorder %s123, %s126
      %p132 = scmp.eq.s32.totalorder %s19, 0
      %p133 = por %p131, %p132
      %p134 = scmp.ne.s32.totalorder %s123, %s126
      %p135 = scmp.eq.s32.totalorder %s24, 1
      %p136 = por %p134, %p135
      %p137 = scmp.ne.s32.totalorder %s126, %s127
      %p138 = scmp.eq.s32.totalorder %s24, 0
      %p139 = por %p137, %p138
      %p140 = scmp.ne.s32.totalorder %s126, %s127
      %p141 = scmp.eq.s32.totalorder %s25, 1
      %p142 = por %p140, %p141
      %p144 = scmp.ne.s32.totalorder %s127, %s143
      %p145 = scmp.eq.s32.totalorder %s25, 0
      %p146 = por %p144, %p145
      %p147 = scmp.le.s32.totalorder 1, %s19
      %p148 = scmp.lt.s32.totalorder %s19, 3
      %p149 = pnand %p147, %p148
      %p150 = pneg %p149
      // Predicated region
      $region9: #{_cat_project_packed.1} parent=5 // pred_check
        _
      $region10: #{_cat_project_packed.1} parent=5 // pred_check_branch
        %152 = sbr.rel (%p149) target = $region12
      $region11: #{_cat_project_packed.1} parent=5 // pred_region
        %s153 = ssub.s32 %s19, 1
        // Predicated region
        $region13: #{_cat_project_packed.1} parent=11 // pred_check
          %p154 = pneg %p92
        $region14: #{_cat_project_packed.1} parent=11 // pred_check_branch
          %156 = sbr.rel (%p154) target = $region16
        $region15: #{_cat_project_packed.1} parent=11 // pred_region
          %158 = vsyncadd [#allocation7], 0
          %s159 = sshll.u32 %s2, 4
          %s160 = int_to_ptr.hbm [resolvable:$true] %s159
          %s161 = sshll.u32 [#allocation8], 4
          %s162 = int_to_ptr.vmem [resolvable:$true] %s161
          %167 = dma.hbm_to_vmem [thread:$0]  %s160, 2048, %s162, [#allocation7], 64, 64, 4
        $region16: #{_cat_project_packed.1} parent=11 // pred_fallthru
          _
        // Predicated region
        $region17: #{_cat_project_packed.1} parent=11 // pred_check
          %p168 = pneg %p113
        $region18: #{_cat_project_packed.1} parent=11 // pred_check_branch
          %170 = sbr.rel (%p168) target = $region20
        $region19: #{_cat_project_packed.1} parent=11 // pred_region
          _
        $region20: #{_cat_project_packed.1} parent=11 // pred_fallthru
          _
      $region12: #{_cat_project_packed.1} parent=5 // pred_fallthru
        _
      %p171 = scmp.lt.s32.totalorder %s19, 2
      // Predicated region
      $region21: #{_cat_project_packed.1} parent=5 // pred_check
        %p172 = pneg %p171
      $region22: #{_cat_project_packed.1} parent=5 // pred_check_branch
        %174 = sbr.rel (%p172) target = $region24
      $region23: #{_cat_project_packed.1} parent=5 // pred_region
        // Predicated region
        $region25: #{_cat_project_packed.1} parent=23 // pred_check
          %p175 = pneg %p39
        $region26: #{_cat_project_packed.1} parent=23 // pred_check_branch
          %177 = sbr.rel (%p175) target = $region28
        $region27: #{_cat_project_packed.1} parent=23 // pred_region
          %s178 = sand.u32 %s29, 1
          %s179 = scalar_lea.sflag [#allocation4], %s178
          %s180 = sand.u32 %s29, 1
          %s181 = smul.addr %s180, 8
          %s182 = scalar_lea.vmem [#allocation3], %s181
          %184 = vsyncadd %s179, 0
          %s185 = smul.addr %s19, 8
          %s186 = scalar_lea.hbm %s0, %s185
          %s188 = sshll.u32 %s186, 4
          %s189 = int_to_ptr.hbm [resolvable:$true] %s188
          %s190 = sshll.u32 %s182, 4
          %s191 = int_to_ptr.vmem [resolvable:$true] %s190
          %193 = dma.hbm_to_vmem [thread:$0]  %s189, 128, %s191, %s179
        $region28: #{_cat_project_packed.1} parent=23 // pred_fallthru
          _
        // Predicated region
        $region29: #{_cat_project_packed.1} parent=23 // pred_check
          %p194 = pneg %p65
        $region30: #{_cat_project_packed.1} parent=23 // pred_check_branch
          %196 = sbr.rel (%p194) target = $region32
        $region31: #{_cat_project_packed.1} parent=23 // pred_region
          %s197 = sand.u32 %s19, 1
          %s198 = scalar_lea.sflag [#allocation7], %s197
          %s199 = sand.u32 %s55, 1
          %s200 = smul.addr %s199, 8
          %s201 = scalar_lea.vmem [#allocation6], %s200
          %203 = vsyncadd %s198, 0
          %s204 = smul.addr %s19, 8
          %s205 = scalar_lea.hbm %s1, %s204
          %s207 = sshll.u32 %s205, 4
          %s208 = int_to_ptr.hbm [resolvable:$true] %s207
          %s209 = sshll.u32 %s201, 4
          %s210 = int_to_ptr.vmem [resolvable:$true] %s209
          %212 = dma.hbm_to_vmem [thread:$0]  %s208, 128, %s210, %s198
        $region32: #{_cat_project_packed.1} parent=23 // pred_fallthru
          _
      $region24: #{_cat_project_packed.1} parent=5 // pred_fallthru
        _
      %p213 = scmp.le.s32.totalorder 1, %s19
      %p214 = scmp.lt.s32.totalorder %s19, 3
      %p215 = pnand %p213, %p214
      %p216 = pneg %p215
      // Predicated region
      $region33: #{_cat_project_packed.1} parent=5 // pred_check
        _
      $region34: #{_cat_project_packed.1} parent=5 // pred_check_branch
        %218 = sbr.rel (%p215) target = $region36
      $region35: #{_cat_project_packed.1} parent=5 // pred_region
        %s219 = ssub.s32 %s19, 1
        %s220 = sand.u32 %s32, 1
        %s221 = scalar_lea.sflag [#allocation4], %s220
        %s222 = sand.u32 %s32, 1
        %s223 = smul.addr %s222, 8
        %s224 = scalar_lea.vmem [#allocation3], %s223
        // Predicated region
        $region37: #{_cat_project_packed.1} parent=35 // pred_check
          %p225 = pneg %p45
        $region38: #{_cat_project_packed.1} parent=35 // pred_check_branch
          %227 = sbr.rel (%p225) target = $region40
        $region39: #{_cat_project_packed.1} parent=35 // pred_region
          %229 = dma.done %s221, 128
        $region40: #{_cat_project_packed.1} parent=35 // pred_fallthru
          _
        %s230 = sand.u32 %s24, 1
        %s231 = scalar_lea.sflag [#allocation7], %s230
        %s232 = sand.u32 %s58, 1
        %s233 = smul.addr %s232, 8
        %s234 = scalar_lea.vmem [#allocation6], %s233
        // Predicated region
        $region41: #{_cat_project_packed.1} parent=35 // pred_check
          %p235 = pneg %p71
        $region42: #{_cat_project_packed.1} parent=35 // pred_check_branch
          %237 = sbr.rel (%p235) target = $region44
        $region43: #{_cat_project_packed.1} parent=35 // pred_region
          %239 = dma.done %s231, 128
        $region44: #{_cat_project_packed.1} parent=35 // pred_fallthru
          _
        // Predicated region
        $region45: #{_cat_project_packed.1} parent=35 // pred_check
          %p240 = pneg %p92
        $region46: #{_cat_project_packed.1} parent=35 // pred_check_branch
          %242 = sbr.rel (%p240) target = $region48
        $region47: #{_cat_project_packed.1} parent=35 // pred_region
          %244 = dma.done [#allocation7], 2048
        $region48: #{_cat_project_packed.1} parent=35 // pred_fallthru
          _
        %s245 = sand.u32 %s32, 1
        %s246 = scalar_lea.sflag [#allocation4], %s245
        %s247 = sand.u32 %s32, 1
        %s248 = smul.addr %s247, 8
        %s249 = scalar_lea.vmem [#allocation3], %s248
        %p250 = pneg %p45
        %p251 = pneg %p42
        %s252 = sand.u32 %s24, 1
        %s253 = scalar_lea.sflag [#allocation7], %s252
        %s254 = sand.u32 %s58, 1
        %s255 = smul.addr %s254, 8
        %s256 = scalar_lea.vmem [#allocation6], %s255
        %p257 = pneg %p71
        %p258 = pneg %p68
        %p259 = pneg %p92
        %p260 = pneg %p89
        %p261 = pneg %p113
        %p262 = pneg %p110
        %p263 = pneg %p139
        %p264 = pneg %p136
        %s265 = sand.u32 %s126, 1
        %s266 = scalar_lea.sflag [#allocation5], %s265
        %s267 = sand.u32 %s126, 1
        %s268 = smul.addr %s267, 8
        %s269 = scalar_lea.vmem [#allocation9], %s268
        %v270 = vld [vmem:[%s224] sm:$0xff]
        %v271 = vpack.c.bf16 %v270, %v270
        %272 = vst [vmem:[#allocation2] sm:$0xf] %v271
        %v273 = vld [vmem:[%s234] sm:$0xff]
        %v274 = vpack.c.bf16 %v273, %v273
        %275 = vst [vmem:[#allocation2 + $0x4] sm:$0xf] %v274
        %v276 = vld [vmem:[#allocation2] sm:$0xff]
        %v277 = vld [vmem:[#allocation8] sm:$0xf]
        %v278 = vld [vmem:[#allocation8 + $0x4] sm:$0xf]
        %v279 = vld [vmem:[#allocation8 + $0x8] sm:$0xf]
        %v280 = vld [vmem:[#allocation8 + $0xc] sm:$0xf]
        %v281 = vld [vmem:[#allocation8 + $0x10] sm:$0xf]
        %v282 = vld [vmem:[#allocation8 + $0x14] sm:$0xf]
        %v283 = vld [vmem:[#allocation8 + $0x18] sm:$0xf]
        %v284 = vld [vmem:[#allocation8 + $0x1c] sm:$0xf]
        %v285 = vld [vmem:[#allocation8 + $0x20] sm:$0xf]
        %v286 = vld [vmem:[#allocation8 + $0x24] sm:$0xf]
        %v287 = vld [vmem:[#allocation8 + $0x28] sm:$0xf]
        %v288 = vld [vmem:[#allocation8 + $0x2c] sm:$0xf]
        %v289 = vld [vmem:[#allocation8 + $0x30] sm:$0xf]
        %v290 = vld [vmem:[#allocation8 + $0x34] sm:$0xf]
        %v291 = vld [vmem:[#allocation8 + $0x38] sm:$0xf]
        %v292 = vld [vmem:[#allocation8 + $0x3c] sm:$0xf]
        %v293 = vld [vmem:[#allocation8 + $0x40] sm:$0xf]
        %v294 = vld [vmem:[#allocation8 + $0x44] sm:$0xf]
        %v295 = vld [vmem:[#allocation8 + $0x48] sm:$0xf]
        %v296 = vld [vmem:[#allocation8 + $0x4c] sm:$0xf]
        %v297 = vld [vmem:[#allocation8 + $0x50] sm:$0xf]
        %v298 = vld [vmem:[#allocation8 + $0x54] sm:$0xf]
        %v299 = vld [vmem:[#allocation8 + $0x58] sm:$0xf]
        %v300 = vld [vmem:[#allocation8 + $0x5c] sm:$0xf]
        %v301 = vld [vmem:[#allocation8 + $0x60] sm:$0xf]
        %v302 = vld [vmem:[#allocation8 + $0x64] sm:$0xf]
        %v303 = vld [vmem:[#allocation8 + $0x68] sm:$0xf]
        %v304 = vld [vmem:[#allocation8 + $0x6c] sm:$0xf]
        %v305 = vld [vmem:[#allocation8 + $0x70] sm:$0xf]
        %v306 = vld [vmem:[#allocation8 + $0x74] sm:$0xf]
        %v307 = vld [vmem:[#allocation8 + $0x78] sm:$0xf]
        %v308 = vld [vmem:[#allocation8 + $0x7c] sm:$0xf]
        %v309 = vld [vmem:[%s3] sm:$0x1]
        %v311 = vperm.slane %v309, 0
        %v314 = vunpack.c.l.b16 %v276
        %v315 = vunpack.c.h.b16 %v276
        %v316 = vpack.c.b16 %v314, %v314
        %v317 = vpack.c.b16 %v315, %v315
        %v352 = vunpack.c.l.b16 %v277
        %v353 = vunpack.c.l.b16 %v278
        %v354 = vunpack.c.l.b16 %v279
        %v355 = vunpack.c.l.b16 %v280
        %v356 = vunpack.c.l.b16 %v281
        %v357 = vunpack.c.l.b16 %v282
        %v358 = vunpack.c.l.b16 %v283
        %v359 = vunpack.c.l.b16 %v284
        %v360 = vunpack.c.l.b16 %v285
        %v361 = vunpack.c.l.b16 %v286
        %v362 = vunpack.c.l.b16 %v287
        %v363 = vunpack.c.l.b16 %v288
        %v364 = vunpack.c.l.b16 %v289
        %v365 = vunpack.c.l.b16 %v290
        %v366 = vunpack.c.l.b16 %v291
        %v367 = vunpack.c.l.b16 %v292
        %v368 = vunpack.c.l.b16 %v293
        %v369 = vunpack.c.l.b16 %v294
        %v370 = vunpack.c.l.b16 %v295
        %v371 = vunpack.c.l.b16 %v296
        %v372 = vunpack.c.l.b16 %v297
        %v373 = vunpack.c.l.b16 %v298
        %v374 = vunpack.c.l.b16 %v299
        %v375 = vunpack.c.l.b16 %v300
        %v376 = vunpack.c.l.b16 %v301
        %v377 = vunpack.c.l.b16 %v302
        %v378 = vunpack.c.l.b16 %v303
        %v379 = vunpack.c.l.b16 %v304
        %v380 = vunpack.c.l.b16 %v305
        %v381 = vunpack.c.l.b16 %v306
        %v382 = vunpack.c.l.b16 %v307
        %v383 = vunpack.c.l.b16 %v308
        %v384 = vpack.c.b16 %v353, %v352
        %v385 = vpack.c.b16 %v355, %v354
        %v386 = vpack.c.b16 %v357, %v356
        %v387 = vpack.c.b16 %v359, %v358
        %v388 = vpack.c.b16 %v361, %v360
        %v389 = vpack.c.b16 %v363, %v362
        %v390 = vpack.c.b16 %v365, %v364
        %v391 = vpack.c.b16 %v367, %v366
        %v392 = vpack.c.b16 %v369, %v368
        %v393 = vpack.c.b16 %v371, %v370
        %v394 = vpack.c.b16 %v373, %v372
        %v395 = vpack.c.b16 %v375, %v374
        %v396 = vpack.c.b16 %v377, %v376
        %v397 = vpack.c.b16 %v379, %v378
        %v398 = vpack.c.b16 %v381, %v380
        %v399 = vpack.c.b16 %v383, %v382
        %416 = vmatpush.bf16.msra.mxu0 %v391
        %417 = vmatpush.bf16.msra.mxu0 %v390
        %418 = vmatpush.bf16.msra.mxu0 %v389
        %419 = vmatpush.bf16.msra.mxu0 %v388
        %420 = vmatpush.bf16.msra.mxu0 %v387
        %421 = vmatpush.bf16.msra.mxu0 %v386
        %422 = vmatpush.bf16.msra.mxu0 %v385
        %423 = vmatpush.bf16.msra.mxu0 %v384
        %424 = vmatmul.bf16.gmra.mxu0 %v316
        %v425 = vpop.f32.mrf.mxu0
        %v426 = vadd.f32 %v311, %v425
        %v427 = vpop.f32.mrf.mxu0
        %428 = vdwg.mxu0
        %429 = vmatpush.bf16.msra.mxu0 %v399
        %430 = vmatpush.bf16.msra.mxu0 %v398
        %431 = vmatpush.bf16.msra.mxu0 %v397
        %432 = vmatpush.bf16.msra.mxu0 %v396
        %433 = vmatpush.bf16.msra.mxu0 %v395
        %434 = vmatpush.bf16.msra.mxu0 %v394
        %435 = vmatpush.bf16.msra.mxu0 %v393
        %436 = vmatpush.bf16.msra.mxu0 %v392
        %437 = vmatmul.bf16.gmra.mxu0 %v317
        %v438 = vpop.f32.mrf.mxu0
        %v439 = vadd.f32 %v426, %v438
        %v440 = vpop.f32.mrf.mxu0
        %441 = vdwg.mxu0
        %v442 = vmax.f32 %v439, 0.0
        %443 = vst [vmem:[%s269] sm:$0xff] %v442
        %s444 = sand.u32 %s126, 1
        %s445 = scalar_lea.sflag [#allocation5], %s444
        %s446 = sand.u32 %s126, 1
        %s447 = smul.addr %s446, 8
        %s448 = scalar_lea.vmem [#allocation9], %s447
        // Predicated region
        $region49: #{_cat_project_packed.1} parent=35 // pred_check
          %p449 = pneg %p136
        $region50: #{_cat_project_packed.1} parent=35 // pred_check_branch
          %451 = sbr.rel (%p449) target = $region52
        $region51: #{_cat_project_packed.1} parent=35 // pred_region
          %453 = vsyncadd %s445, 0
          %s454 = smul.addr %s24, 8
          %s455 = scalar_lea.hbm %s4, %s454
          %s457 = sshll.u32 %s448, 4
          %s458 = int_to_ptr.vmem [resolvable:$true] %s457
          %s459 = sshll.u32 %s455, 4
          %s460 = int_to_ptr.hbm [resolvable:$true] %s459
          %462 = dma.vmem_to_hbm [thread:$0]  %s458, 128, %s460, %s445
        $region52: #{_cat_project_packed.1} parent=35 // pred_fallthru
          _
      $region36: #{_cat_project_packed.1} parent=5 // pred_fallthru
        _
      %p463 = scmp.le.s32.totalorder 2, %s19
      // Predicated region
      $region53: #{_cat_project_packed.1} parent=5 // pred_check
        %p464 = pneg %p463
      $region54: #{_cat_project_packed.1} parent=5 // pred_check_branch
        %466 = sbr.rel (%p464) target = $region56
      $region55: #{_cat_project_packed.1} parent=5 // pred_region
        %s467 = ssub.s32 %s19, 2
        // Predicated region
        $region57: #{_cat_project_packed.1} parent=55 // pred_check
          %p468 = pneg %p142
        $region58: #{_cat_project_packed.1} parent=55 // pred_check_branch
          %470 = sbr.rel (%p468) target = $region60
        $region59: #{_cat_project_packed.1} parent=55 // pred_region
          %s471 = sand.u32 %s127, 1
          %s472 = scalar_lea.sflag [#allocation5], %s471
          %s473 = sand.u32 %s127, 1
          %s474 = smul.addr %s473, 8
          %s475 = scalar_lea.vmem [#allocation9], %s474
          %477 = dma.done %s472, 128
        $region60: #{_cat_project_packed.1} parent=55 // pred_fallthru
          _
      $region56: #{_cat_project_packed.1} parent=5 // pred_fallthru
        _
    $region6: #{_cat_project_packed.1} parent=1 // loop_footer
      %s23 = sadd.s32 1, %s19
    $region7: #{_cat_project_packed.1} parent=1 // loop_footer_branch
      %18 = sbr.rel target = $region3
    $region8: #{_cat_project_packed.1} parent=1 // loop_exit
      _
    %478 = vsyncpa [#allocation4], 1
    %s479 = scalar_lea.sflag [#allocation4], 1
    %480 = vsyncpa %s479, 1
    %481 = vsyncpa [#allocation7], 1
    %s482 = scalar_lea.sflag [#allocation7], 1
    %483 = vsyncpa %s482, 1
    %484 = vsyncpa [#allocation5], 1
    %s485 = scalar_lea.sflag [#allocation5], 1
    %486 = vsyncpa %s485, 1

</llo_original>
